<compile_context>
chip_gen: v7x
topology: tpu7x:2x2x1
jax: 0.10.0
libtpu: 0.0.40
codegen_flags: <defaults>
</compile_context>

<pallas_src>
import functools
import math

import jax
import jax.numpy as jnp
from jax.experimental import pallas as pl
from jax.experimental.pallas import tpu as pltpu


def _round_up(x, m):
    return (x + m - 1) // m * m


def _ntxent_kernel(zrow_ref, zcol_ref, out_ref, m_sc, l_sc, p_sc, *,
                   inv_temp, batch_size, n_valid, row_tile, col_tile, n_pad):
    ri = pl.program_id(0)
    ci = pl.program_id(1)
    n_col = pl.num_programs(1)

    @pl.when(ci == 0)
    def _init():
        m_sc[...] = jnp.full((row_tile, 1), -jnp.inf, dtype=jnp.float32)
        l_sc[...] = jnp.zeros((row_tile, 1), dtype=jnp.float32)
        p_sc[...] = jnp.zeros((row_tile, 1), dtype=jnp.float32)

    # (TM, TN) similarity tile straight on the MXU: contract the feature dim
    # (no explicit transpose), bf16/f32 operands with an f32 accumulator.
    sim = jax.lax.dot_general(
        zrow_ref[...], zcol_ref[...],
        dimension_numbers=(((1,), (1,)), ((), ())),
        preferred_element_type=jnp.float32)

    # (TM,1) / (1,TN) index vectors only; comparisons broadcast -> no (TM,TN) int32 slabs.
    grow = ri * row_tile + jax.lax.broadcasted_iota(jnp.int32, (row_tile, 1), 0)
    gcol = ci * col_tile + jax.lax.broadcasted_iota(jnp.int32, (1, col_tile), 1)

    # fill_diagonal_(-5.0) followed by clamp(-1,1) == diagonal set to -1: fold into one
    # select.  Then temperature scale; padded columns are knocked out of the softmax
    # denominator (statically skipped if there is no padding).
    sim = jnp.where(gcol == grow, jnp.float32(-1.0), jnp.clip(sim, -1.0, 1.0))
    logits = sim * jnp.float32(inv_temp)
    if n_pad != n_valid:
        logits = jnp.where(gcol < n_valid, logits, jnp.float32(-1e30))

    # Online (streaming) softmax statistics, carried across column tiles.
    m_prev = m_sc[...]
    m_new = jnp.maximum(m_prev, jnp.max(logits, axis=-1, keepdims=True))
    alpha = jnp.exp(m_prev - m_new)
    l_sc[...] = alpha * l_sc[...] + jnp.sum(jnp.exp(logits - m_new),
                                            axis=-1, keepdims=True)
    m_sc[...] = m_new

    # labels = cat([arange(B), arange(B)]) -> label(r) = r if r < B else r - B.
    # The picked column appears in exactly one column tile, so a masked row-sum
    # accumulates the picked (already temperature-scaled, diag/clamp-folded) logit.
    label = jnp.where(grow < batch_size, grow, grow - batch_size)
    p_sc[...] += jnp.sum(jnp.where(gcol == label, logits, jnp.float32(0.0)),
                         axis=-1, keepdims=True)

    @pl.when(ci == n_col - 1)
    def _finish():
        # Single log_softmax: CrossEntropyLoss's internal log_softmax applied on top
        # of F.log_softmax output is the identity, so one pass is exact.
        lse = m_sc[...] + jnp.log(l_sc[...])
        row_loss = -(p_sc[...] - lse)
        out_ref[...] = jnp.where(grow < n_valid, row_loss, jnp.float32(0.0))


def ntxent_loss_pallas(z_i, z_j, temperature=0.5, *, row_tile=256, col_tile=256,
                       compute_dtype=jnp.bfloat16):
    """NT-Xent loss matching NTXentLoss.forward; z_i, z_j: (batch, feature)."""
    temperature = max(0.1, min(1.0, float(temperature)))
    B, D = z_i.shape
    N = 2 * B

    # L2-normalize in the wrapper (cheap, fuses in XLA); kernel streams one
    # already-normalized operand.  F.normalize(p=2, dim=1): x / max(||x||, 1e-12).
    z = jnp.concatenate([z_i, z_j], axis=0).astype(jnp.float32)
    nrm = jnp.sqrt(jnp.sum(z * z, axis=1, keepdims=True))
    z = z / jnp.maximum(nrm, jnp.float32(1e-12))
    z = z.astype(compute_dtype)

    # (sublane, lane) aligned tiles; 16-row multiples for bf16 sublane packing.
    sub = 16 if compute_dtype == jnp.bfloat16 else 8
    tm = _round_up(min(int(row_tile), N), sub)
    tn = _round_up(min(int(col_tile), N), 128)
    n_pad = _round_up(N, math.lcm(tm, tn))
    d_pad = _round_up(D, 128)
    z = jnp.pad(z, ((0, n_pad - N), (0, d_pad - D)))

    n_row_tiles = n_pad // tm
    n_col_tiles = n_pad // tn

    kernel = functools.partial(
        _ntxent_kernel, inv_temp=1.0 / temperature, batch_size=B, n_valid=N,
        row_tile=tm, col_tile=tn, n_pad=n_pad)

    # Explicit VMEM budget sized from the actual buffers (cap 48 MiB: v7x-safe).
    dsize = jnp.dtype(compute_dtype).itemsize
    est = (3 * (tm + tn) * d_pad * dsize     # pipelined operand buffers
           + 8 * tm * tn * 4                 # (TM,TN) f32 temporaries
           + 8 * tm * 4)                     # scratches + output block
    vmem_limit = int(min(48 * 1024 * 1024, max(16 * 1024 * 1024, 2 * est)))

    row_losses = pl.pallas_call(
        kernel,
        out_shape=jax.ShapeDtypeStruct((n_pad, 1), jnp.float32),
        grid=(n_row_tiles, n_col_tiles),
        in_specs=[pl.BlockSpec((tm, d_pad), lambda ri, ci: (ri, 0)),   # row tile of z
                  pl.BlockSpec((tn, d_pad), lambda ri, ci: (ci, 0))],  # col tile of z
        out_specs=pl.BlockSpec((tm, 1), lambda ri, ci: (ri, 0)),
        scratch_shapes=[pltpu.VMEM((tm, 1), jnp.float32),   # running max
                        pltpu.VMEM((tm, 1), jnp.float32),   # running denominator
                        pltpu.VMEM((tm, 1), jnp.float32)],  # picked logit
        compiler_params=pltpu.CompilerParams(
            # Row axis has no carried state -> megacore-parallel on v7x.
            # Column (reduction) axis carries the online-softmax scratch -> arbitrary.
            dimension_semantics=("parallel", "arbitrary"),
            vmem_limit_bytes=vmem_limit),
    )(z, z)

    return jnp.sum(row_losses) / jnp.float32(N)


def ntxent_loss_ref(z_i, z_j, temperature=0.5):
    """Pure-JAX reference mirroring the PyTorch forward exactly (incl. double log_softmax)."""
    temperature = max(0.1, min(1.0, float(temperature)))
    B = z_i.shape[0]

    def l2norm(x):
        n = jnp.sqrt(jnp.sum(x * x, axis=1, keepdims=True))
        return x / jnp.maximum(n, 1e-12)

    z = jnp.concatenate([l2norm(z_i), l2norm(z_j)], axis=0)
    sim = z @ z.T
    N = 2 * B
    sim = jnp.where(jnp.eye(N, dtype=bool), -5.0, sim)
    sim = jnp.clip(sim, -1.0, 1.0)
    logits = sim / temperature
    lp = jax.nn.log_softmax(jax.nn.log_softmax(logits, axis=-1), axis=-1)
    labels = jnp.concatenate([jnp.arange(B), jnp.arange(B)])
    return -jnp.mean(lp[jnp.arange(N), labels])


if __name__ == "__main__":
    key = jax.random.PRNGKey(0)

    cases = [
        # f32 operands -> exact logic check (single tile of columns).
        dict(B=4, D=32, temperature=0.5, row_tile=256, col_tile=256,
             compute_dtype=jnp.float32, atol=1e-4),
        # Unaligned shapes -> padding / mask path, bf16 MXU operands.
        dict(B=5, D=40, temperature=0.7, row_tile=256, col_tile=256,
             compute_dtype=jnp.bfloat16, atol=1e-2),
        # Multiple row AND column tiles -> streaming online-softmax path, exact (f32).
        dict(B=72, D=48, temperature=0.5, row_tile=64, col_tile=128,
             compute_dtype=jnp.float32, atol=1e-4),
        # Same tiling with bf16 matmul operands (MXU-native path).
        dict(B=72, D=48, temperature=0.5, row_tile=64, col_tile=128,
             compute_dtype=jnp.bfloat16, atol=1e-2),
    ]
    for c in cases:
        key, k1, k2 = jax.random.split(key, 3)
        z_i = jax.random.normal(k1, (c["B"], c["D"]), dtype=jnp.float32)
        z_j = jax.random.normal(k2, (c["B"], c["D"]), dtype=jnp.float32)

        loss = jax.block_until_ready(
            ntxent_loss_pallas(z_i, z_j, c["temperature"],
                               row_tile=c["row_tile"], col_tile=c["col_tile"],
                               compute_dtype=c["compute_dtype"]))
        ref = jax.block_until_ready(ntxent_loss_ref(z_i, z_j, c["temperature"]))

        assert jnp.allclose(loss, ref, atol=c["atol"], rtol=c["atol"]), (
            c, float(loss), float(ref))

    print("KERNEL_OK")
</pallas_src>

<mosaic_0001>
module attributes {stable_mosaic.version = 11 : i64} {
  func.func @_ntxent_kernel(%arg0: i32, %arg1: i32, %arg2: memref<8x128xf32, #tpu.memory_space<vmem>>, %arg3: memref<128x128xf32, #tpu.memory_space<vmem>>, %arg4: memref<8x1xf32, #tpu.memory_space<vmem>>, %arg5: memref<8x1xf32, #tpu.memory_space<vmem>>, %arg6: memref<8x1xf32, #tpu.memory_space<vmem>>, %arg7: memref<8x1xf32, #tpu.memory_space<vmem>>) attributes {dimension_semantics = [#tpu.dimension_semantics<parallel>, #tpu.dimension_semantics<arbitrary>], iteration_bounds = array<i64: 16, 1>, scalar_prefetch = 0 : i64, scratch_operands = 3 : i64, tpu.core_type = #tpu.core_type<tc>, window_params = [{transform_indices = @transform_0, window_bounds = array<i64: 8, 128>}, {transform_indices = @transform_1, window_bounds = array<i64: 128, 128>}, {transform_indices = @transform_2, window_bounds = array<i64: 8, 1>}]} {
    %c0_i32 = arith.constant 0 : i32
    %0 = arith.cmpi eq, %arg1, %c0_i32 : i32
    %1 = arith.extui %0 : i1 to i32
    %c0_i32_0 = arith.constant 0 : i32
    %2 = arith.cmpi ne, %1, %c0_i32_0 : i32
    scf.if %2 {
      %cst_29 = arith.constant 0xFF800000 : f32
      %65 = vector.broadcast %cst_29 : f32 to vector<8x1xf32>
      %c0_30 = arith.constant 0 : index
      %c0_31 = arith.constant 0 : index
      %66 = vector.load %arg5[%c0_30, %c0_31] : memref<8x1xf32, #tpu.memory_space<vmem>>, vector<8x1xf32>
      tpu.vector_store %arg5[%c0_30, %c0_31], %65 {strides = array<i32>} : memref<8x1xf32, #tpu.memory_space<vmem>>, vector<8x1xf32>,
      %cst_32 = arith.constant 0.000000e+00 : f32
      %67 = vector.broadcast %cst_32 : f32 to vector<8x1xf32>
      %c0_33 = arith.constant 0 : index
      %c0_34 = arith.constant 0 : index
      %68 = vector.load %arg6[%c0_33, %c0_34] : memref<8x1xf32, #tpu.memory_space<vmem>>, vector<8x1xf32>
      tpu.vector_store %arg6[%c0_33, %c0_34], %67 {strides = array<i32>} : memref<8x1xf32, #tpu.memory_space<vmem>>, vector<8x1xf32>,
      %cst_35 = arith.constant 0.000000e+00 : f32
      %69 = vector.broadcast %cst_35 : f32 to vector<8x1xf32>
      %c0_36 = arith.constant 0 : index
      %c0_37 = arith.constant 0 : index
      %70 = vector.load %arg7[%c0_36, %c0_37] : memref<8x1xf32, #tpu.memory_space<vmem>>, vector<8x1xf32>
      tpu.vector_store %arg7[%c0_36, %c0_37], %69 {strides = array<i32>} : memref<8x1xf32, #tpu.memory_space<vmem>>, vector<8x1xf32>,
    } else {
    }
    %c0 = arith.constant 0 : index
    %c0_1 = arith.constant 0 : index
    %3 = vector.load %arg2[%c0, %c0_1] : memref<8x128xf32, #tpu.memory_space<vmem>>, vector<8x128xf32>
    %c0_2 = arith.constant 0 : index
    %c0_3 = arith.constant 0 : index
    %4 = vector.load %arg3[%c0_2, %c0_3] : memref<128x128xf32, #tpu.memory_space<vmem>>, vector<128x128xf32>
    %cst = arith.constant dense<0.000000e+00> : vector<8x128xf32>
    %5 = tpu.matmul %3, %4, %cst {dimension_numbers = #tpu.dot_dimension_numbers<[1], [1], [0], [0], [0, 0, 1, 0], [], []>} : vector<8x128xf32>, vector<128x128xf32>, vector<8x128xf32> -> vector<8x128xf32>
    %c8_i32 = arith.constant 8 : i32
    %6 = arith.muli %arg0, %c8_i32 : i32
    %7 = tpu.iota {dimensions = array<i32: 0>} : vector<8x1xi32>
    %8 = vector.broadcast %6 : i32 to vector<8x1xi32>
    %9 = arith.addi %8, %7 : vector<8x1xi32>
    %c128_i32 = arith.constant 128 : i32
    %10 = arith.muli %arg1, %c128_i32 : i32
    %11 = tpu.iota {dimensions = array<i32: 1>} : vector<1x128xi32>
    %12 = vector.broadcast %10 : i32 to vector<1x128xi32>
    %13 = arith.addi %12, %11 : vector<1x128xi32>
    %14 = vector.broadcast %13 : vector<1x128xi32> to vector<8x128xi32>
    %15 = vector.broadcast %9 : vector<8x1xi32> to vector<8x128xi32>
    %16 = arith.cmpi eq, %14, %15 : vector<8x128xi32>
    %cst_4 = arith.constant -1.000000e+00 : f32
    %cst_5 = arith.constant 1.000000e+00 : f32
    %17 = vector.broadcast %cst_4 : f32 to vector<8x128xf32>
    %18 = arith.maximumf %17, %5 : vector<8x128xf32>
    %19 = vector.broadcast %cst_5 : f32 to vector<8x128xf32>
    %20 = arith.minimumf %19, %18 : vector<8x128xf32>
    %cst_6 = arith.constant -1.000000e+00 : f32
    %21 = vector.broadcast %cst_6 : f32 to vector<8x128xf32>
    %22 = arith.select %16, %21, %20 : vector<8x128xi1>, vector<8x128xf32>
    %cst_7 = arith.constant 2.000000e+00 : f32
    %23 = vector.broadcast %cst_7 : f32 to vector<8x128xf32>
    %24 = arith.mulf %22, %23 : vector<8x128xf32>
    %c8_i32_8 = arith.constant 8 : i32
    %25 = vector.broadcast %c8_i32_8 : i32 to vector<1x128xi32>
    %26 = arith.cmpi slt, %13, %25 : vector<1x128xi32>
    %cst_9 = arith.constant -1.000000e+30 : f32
    %27 = vector.shape_cast %26 : vector<1x128xi1> to vector<1x128xi1>
    %28 = vector.broadcast %27 : vector<1x128xi1> to vector<8x128xi1>
    %29 = vector.broadcast %cst_9 : f32 to vector<8x128xf32>
    %30 = arith.select %28, %24, %29 : vector<8x128xi1>, vector<8x128xf32>
    %c0_10 = arith.constant 0 : index
    %c0_11 = arith.constant 0 : index
    %31 = vector.load %arg5[%c0_10, %c0_11] : memref<8x1xf32, #tpu.memory_space<vmem>>, vector<8x1xf32>
    %cst_12 = arith.constant dense<0xFF800000> : vector<8xf32>
    %32 = vector.multi_reduction <maximumf>, %30, %cst_12 [1] : vector<8x128xf32> to vector<8xf32>
    %33 = vector.shape_cast %32 : vector<8xf32> to vector<8x1xf32>
    %34 = arith.maximumf %31, %33 : vector<8x1xf32>
    %35 = arith.subf %31, %34 : vector<8x1xf32>
    %36 = math.exp %35 : vector<8x1xf32>
    %c0_13 = arith.constant 0 : index
    %c0_14 = arith.constant 0 : index
    %37 = vector.load %arg6[%c0_13, %c0_14] : memref<8x1xf32, #tpu.memory_space<vmem>>, vector<8x1xf32>
    %38 = arith.mulf %36, %37 : vector<8x1xf32>
    %39 = vector.broadcast %34 : vector<8x1xf32> to vector<8x128xf32>
    %40 = arith.subf %30, %39 : vector<8x128xf32>
    %41 = math.exp %40 : vector<8x128xf32>
    %cst_15 = arith.constant dense<0.000000e+00> : vector<8xf32>
    %42 = vector.multi_reduction <add>, %41, %cst_15 [1] : vector<8x128xf32> to vector<8xf32>
    %43 = vector.shape_cast %42 : vector<8xf32> to vector<8x1xf32>
    %44 = arith.addf %38, %43 : vector<8x1xf32>
    %c0_16 = arith.constant 0 : index
    %c0_17 = arith.constant 0 : index
    %45 = vector.load %arg6[%c0_16, %c0_17] : memref<8x1xf32, #tpu.memory_space<vmem>>, vector<8x1xf32>
    tpu.vector_store %arg6[%c0_16, %c0_17], %44 {strides = array<i32>} : memref<8x1xf32, #tpu.memory_space<vmem>>, vector<8x1xf32>,
    %c0_18 = arith.constant 0 : index
    %c0_19 = arith.constant 0 : index
    %46 = vector.load %arg5[%c0_18, %c0_19] : memref<8x1xf32, #tpu.memory_space<vmem>>, vector<8x1xf32>
    tpu.vector_store %arg5[%c0_18, %c0_19], %34 {strides = array<i32>} : memref<8x1xf32, #tpu.memory_space<vmem>>, vector<8x1xf32>,
    %c4_i32 = arith.constant 4 : i32
    %47 = vector.broadcast %c4_i32 : i32 to vector<8x1xi32>
    %48 = arith.cmpi slt, %9, %47 : vector<8x1xi32>
    %c4_i32_20 = arith.constant 4 : i32
    %49 = vector.broadcast %c4_i32_20 : i32 to vector<8x1xi32>
    %50 = arith.subi %9, %49 : vector<8x1xi32>
    %51 = arith.select %48, %9, %50 : vector<8x1xi1>, vector<8x1xi32>
    %c0_21 = arith.constant 0 : index
    %c0_22 = arith.constant 0 : index
    %52 = vector.load %arg7[%c0_21, %c0_22] : memref<8x1xf32, #tpu.memory_space<vmem>>, vector<8x1xf32>
    %53 = vector.broadcast %13 : vector<1x128xi32> to vector<8x128xi32>
    %54 = vector.broadcast %51 : vector<8x1xi32> to vector<8x128xi32>
    %55 = arith.cmpi eq, %53, %54 : vector<8x128xi32>
    %cst_23 = arith.constant 0.000000e+00 : f32
    %56 = vector.broadcast %cst_23 : f32 to vector<8x128xf32>
    %57 = arith.select %55, %30, %56 : vector<8x128xi1>, vector<8x128xf32>
    %cst_24 = arith.constant dense<0.000000e+00> : vector<8xf32>
    %58 = vector.multi_reduction <add>, %57, %cst_24 [1] : vector<8x128xf32> to vector<8xf32>
    %59 = vector.shape_cast %58 : vector<8xf32> to vector<8x1xf32>
    %60 = arith.addf %52, %59 : vector<8x1xf32>
    %c0_25 = arith.constant 0 : index
    %c0_26 = arith.constant 0 : index
    %61 = vector.load %arg7[%c0_25, %c0_26] : memref<8x1xf32, #tpu.memory_space<vmem>>, vector<8x1xf32>
    tpu.vector_store %arg7[%c0_25, %c0_26], %60 {strides = array<i32>} : memref<8x1xf32, #tpu.memory_space<vmem>>, vector<8x1xf32>,
    %c0_i32_27 = arith.constant 0 : i32
    %62 = arith.cmpi eq, %arg1, %c0_i32_27 : i32
    %63 = arith.extui %62 : i1 to i32
    %c0_i32_28 = arith.constant 0 : i32
    %64 = arith.cmpi ne, %63, %c0_i32_28 : i32
    scf.if %64 {
      %c0_29 = arith.constant 0 : index
      %c0_30 = arith.constant 0 : index
      %65 = vector.load %arg5[%c0_29, %c0_30] : memref<8x1xf32, #tpu.memory_space<vmem>>, vector<8x1xf32>
      %c0_31 = arith.constant 0 : index
      %c0_32 = arith.constant 0 : index
      %66 = vector.load %arg6[%c0_31, %c0_32] : memref<8x1xf32, #tpu.memory_space<vmem>>, vector<8x1xf32>
      %67 = math.log %66 : vector<8x1xf32>
      %68 = arith.addf %65, %67 : vector<8x1xf32>
      %c0_33 = arith.constant 0 : index
      %c0_34 = arith.constant 0 : index
      %69 = vector.load %arg7[%c0_33, %c0_34] : memref<8x1xf32, #tpu.memory_space<vmem>>, vector<8x1xf32>
      %70 = arith.subf %69, %68 : vector<8x1xf32>
      %cst_35 = arith.constant 0.000000e+00 : f32
      %71 = vector.broadcast %cst_35 : f32 to vector<8x1xf32>
      %72 = arith.subf %71, %70 : vector<8x1xf32>
      %c8_i32_36 = arith.constant 8 : i32
      %73 = vector.broadcast %c8_i32_36 : i32 to vector<8x1xi32>
      %74 = arith.cmpi slt, %9, %73 : vector<8x1xi32>
      %cst_37 = arith.constant 0.000000e+00 : f32
      %75 = vector.broadcast %cst_37 : f32 to vector<8x1xf32>
      %76 = arith.select %74, %72, %75 : vector<8x1xi1>, vector<8x1xf32>
      %c0_38 = arith.constant 0 : index
      %c0_39 = arith.constant 0 : index
      %77 = vector.load %arg4[%c0_38, %c0_39] : memref<8x1xf32, #tpu.memory_space<vmem>>, vector<8x1xf32>
      tpu.vector_store %arg4[%c0_38, %c0_39], %76 {strides = array<i32>} : memref<8x1xf32, #tpu.memory_space<vmem>>, vector<8x1xf32>,
    } else {
    }
    return
  }
  func.func @transform_0(%arg0: i32, %arg1: i32) -> (i32, i32) {
    %c0_i32 = arith.constant 0 : i32
    %c0_i32_0 = arith.constant 0 : i32
    return %arg0, %c0_i32 : i32, i32
  }
  func.func @transform_1(%arg0: i32, %arg1: i32) -> (i32, i32) {
    %c0_i32 = arith.constant 0 : i32
    %c0_i32_0 = arith.constant 0 : i32
    return %arg1, %c0_i32 : i32, i32
  }
  func.func @transform_2(%arg0: i32, %arg1: i32) -> (i32, i32) {
    %c0_i32 = arith.constant 0 : i32
    %c0_i32_0 = arith.constant 0 : i32
    return %arg0, %c0_i32 : i32, i32
  }
}

</mosaic_0001>

<llo_original>
// kernel: tpu_custom_call.1
$region0: #{tpu_custom_call.1}
  #allocation0 [shape = 'u32[]', space=smem, size = 0x4, offset = 0x4, fixed_abs, tag = 'smem constant byte address 0x4 - core index']
  #allocation1 [shape = 'u32[144,128]{1,0:T(1,128)}', space=vmem, size = 0x12000, scoped, tag = 'internal scratch']
  #allocation2 [shape = 'f32[8,1]{1,0:T(8,128)}', space=vmem, size = 0x1000, scoped, tag = 'scratch operand']
  #allocation3 [shape = 'f32[8,1]{1,0:T(8,128)}', space=vmem, size = 0x1000, scoped, tag = 'scratch operand']
  #allocation4 [shape = 'f32[8,1]{1,0:T(8,128)}', space=vmem, size = 0x1000, scoped, tag = 'scratch operand']
  %s0 = inlined_call_operand.hbm [shape: f32[128,128], index: 0, kind: input, shape index: {}]
  %s1 = inlined_call_operand.hbm [shape: f32[128,128], index: 1, kind: input, shape index: {}]
  %s2 = inlined_call_operand.vmem [shape: f32[128,1], index: 2, kind: output, shape index: {}]
  %s3 = sld [smem:[#allocation0]]
  $region57: #{tpu_custom_call.1} parent=0
    _
  %s5 = ssub.s32 1, %s3
  %s6 = scalar_select 0, %s5, %s3
  $region1: #{tpu_custom_call.1} parent=0
    #allocation5 [shape = 'u8[8192]{0}', space=vmem, size = 0x2000, scoped, tag = 'input window, operand 0']
    #allocation6 [shape = 's32[2]{0}', space=sflag, size = 0x8, scoped, tag = 'scoped memory for tpu_custom_call.1']
    #allocation7 [shape = 'u8[65536]{0}', space=vmem, size = 0x10000, scoped, tag = 'input window, operand 1, single buffered']
    #allocation8 [shape = 's32[1]{0}', space=sflag, size = 0x4, scoped, tag = 'scoped memory for tpu_custom_call.1']
    %7 = vsyncpa [#allocation6], 0
    %s8 = scalar_lea.sflag [#allocation6], 1
    %9 = vsyncpa %s8, 0
    %10 = vsyncpa [#allocation8], 0
    loop: start=0, step=1, limit=18
    $region2: #{tpu_custom_call.1} parent=1 // loop_pre_header
      _
    $region3: #{tpu_custom_call.1} parent=1 // loop_header
      %s12 = sphi 0, %s16
      %p13 = scmp.ge.s32.totalorder %s12, 18
      %s19 = sphi 0, %s31
      %s20 = sphi 0, %s27
      %s21 = sphi 0, %s19
      %s22 = sphi 0, %s20
      %s23 = sphi 0, %s21
      %s24 = sphi 0, %s22
      %s34 = sphi 0, %s36
      %s37 = sphi 0, %s34
      %s38 = sphi 0, %s37
      %s54 = sphi 0, %s38
      %s60 = sphi 0, %s62
      %s63 = sphi 0, %s60
      %s64 = sphi 0, %s63
      %s80 = sphi 0, %s64
      %s86 = sphi 0, %s88
      %s89 = sphi 0, %s86
      %s90 = sphi 0, %s89
      %s106 = sphi 0, %s90
    $region4: #{tpu_custom_call.1} parent=1 // loop_header_branch
      %15 = sbr.rel (%p13) target = $region8
    $region5: #{tpu_custom_call.1} parent=1 // loop_body
      %s17 = ssub.s32 %s12, 1
      %s18 = ssub.s32 %s12, 2
      %s25 = sadd.s32 1, %s20
      %p26 = scmp.ge.s32.totalorder %s25, 1
      %s27 = scalar_select %p26, 0, %s25
      %s28 = sadd.s32 1, %s19
      %s29 = scalar_select %p26, %s28, %s19
      %p30 = scmp.ge.s32.totalorder %s29, 16
      %s31 = scalar_select %p30, 0, %s29
      %s32 = ssub.s32 %s19, %s31
      %p33 = scmp.eq.s32.totalorder %s32, 0
      %s35 = sadd.s32 %s34, 1
      %s36 = scalar_select %p33, %s34, %s35
      %p39 = pneg %p33
      %p40 = scmp.eq.s32.totalorder %s12, 15
      %p41 = por %p39, %p40
      %p42 = scmp.ne.s32.totalorder %s34, %s37
      %p43 = scmp.eq.s32.totalorder %s12, 0
      %p44 = por %p42, %p43
      %p45 = scmp.ne.s32.totalorder %s34, %s37
      %p46 = scmp.eq.s32.totalorder %s17, 15
      %p47 = por %p45, %p46
      %p48 = scmp.ne.s32.totalorder %s37, %s38
      %p49 = scmp.eq.s32.totalorder %s17, 0
      %p50 = por %p48, %p49
      %p51 = scmp.ne.s32.totalorder %s37, %s38
      %p52 = scmp.eq.s32.totalorder %s18, 15
      %p53 = por %p51, %p52
      %p55 = scmp.ne.s32.totalorder %s38, %s54
      %p56 = scmp.eq.s32.totalorder %s18, 0
      %p57 = por %p55, %p56
      %s58 = ssub.s32 %s20, %s27
      %p59 = scmp.eq.s32.totalorder %s58, 0
      %s61 = sadd.s32 %s60, 1
      %s62 = scalar_select %p59, %s60, %s61
      %p65 = pneg %p59
      %p66 = scmp.eq.s32.totalorder %s12, 15
      %p67 = por %p65, %p66
      %p68 = scmp.ne.s32.totalorder %s60, %s63
      %p69 = scmp.eq.s32.totalorder %s12, 0
      %p70 = por %p68, %p69
      %p71 = scmp.ne.s32.totalorder %s60, %s63
      %p72 = scmp.eq.s32.totalorder %s17, 15
      %p73 = por %p71, %p72
      %p74 = scmp.ne.s32.totalorder %s63, %s64
      %p75 = scmp.eq.s32.totalorder %s17, 0
      %p76 = por %p74, %p75
      %p77 = scmp.ne.s32.totalorder %s63, %s64
      %p78 = scmp.eq.s32.totalorder %s18, 15
      %p79 = por %p77, %p78
      %p81 = scmp.ne.s32.totalorder %s64, %s80
      %p82 = scmp.eq.s32.totalorder %s18, 0
      %p83 = por %p81, %p82
      %s84 = ssub.s32 %s19, %s31
      %p85 = scmp.eq.s32.totalorder %s84, 0
      %s87 = sadd.s32 %s86, 1
      %s88 = scalar_select %p85, %s86, %s87
      %p91 = pneg %p85
      %p92 = scmp.eq.s32.totalorder %s12, 15
      %p93 = por %p91, %p92
      %p94 = scmp.ne.s32.totalorder %s86, %s89
      %p95 = scmp.eq.s32.totalorder %s12, 0
      %p96 = por %p94, %p95
      %p97 = scmp.ne.s32.totalorder %s86, %s89
      %p98 = scmp.eq.s32.totalorder %s17, 15
      %p99 = por %p97, %p98
      %p100 = scmp.ne.s32.totalorder %s89, %s90
      %p101 = scmp.eq.s32.totalorder %s17, 0
      %p102 = por %p100, %p101
      %p103 = scmp.ne.s32.totalorder %s89, %s90
      %p104 = scmp.eq.s32.totalorder %s18, 15
      %p105 = por %p103, %p104
      %p107 = scmp.ne.s32.totalorder %s90, %s106
      %p108 = scmp.eq.s32.totalorder %s18, 0
      %p109 = por %p107, %p108
      %p110 = scmp.le.s32.totalorder 1, %s12
      %p111 = scmp.lt.s32.totalorder %s12, 17
      %p112 = pnand %p110, %p111
      %p113 = pneg %p112
      // Predicated region
      $region9: #{tpu_custom_call.1} parent=5 // pred_check
        _
      $region10: #{tpu_custom_call.1} parent=5 // pred_check_branch
        %115 = sbr.rel (%p112) target = $region12
      $region11: #{tpu_custom_call.1} parent=5 // pred_region
        %s116 = ssub.s32 %s12, 1
        // Predicated region
        $region13: #{tpu_custom_call.1} parent=11 // pred_check
          %p117 = pneg %p76
        $region14: #{tpu_custom_call.1} parent=11 // pred_check_branch
          %119 = sbr.rel (%p117) target = $region16
        $region15: #{tpu_custom_call.1} parent=11 // pred_region
          %s120 = smul.u32 16, %s22
          %s122 = ssub.s32 2048, 2048
          %123 = vsyncadd [#allocation8], %s122
          %s124 = smul.addr %s120, 128
          %s125 = scalar_lea.hbm %s1, %s124
          %s126 = sshll.u32 [#allocation7], 4
          %s127 = int_to_ptr.vmem [resolvable:$true] %s126
          %132 = dma.hbm_to_vmem [thread:$0]  %s125, 2048, %s127, [#allocation8], 128, 128, 8
        $region16: #{tpu_custom_call.1} parent=11 // pred_fallthru
          _
      $region12: #{tpu_custom_call.1} parent=5 // pred_fallthru
        _
      %p133 = scmp.lt.s32.totalorder %s12, 16
      // Predicated region
      $region17: #{tpu_custom_call.1} parent=5 // pred_check
        %p134 = pneg %p133
      $region18: #{tpu_custom_call.1} parent=5 // pred_check_branch
        %136 = sbr.rel (%p134) target = $region20
      $region19: #{tpu_custom_call.1} parent=5 // pred_region
        // Predicated region
        $region21: #{tpu_custom_call.1} parent=19 // pred_check
          %p137 = pneg %p44
        $region22: #{tpu_custom_call.1} parent=19 // pred_check_branch
          %139 = sbr.rel (%p137) target = $region24
        $region23: #{tpu_custom_call.1} parent=19 // pred_region
          %s140 = sand.u32 %s34, 1
          %s141 = scalar_lea.sflag [#allocation6], %s140
          %s142 = sand.u32 %s34, 1
          %s143 = smul.addr %s142, 8
          %s144 = scalar_lea.vmem [#allocation5], %s143
          %s146 = ssub.s32 128, 128
          %147 = vsyncadd %s141, %s146
          %s148 = smul.addr %s19, 128
          %s149 = scalar_lea.hbm %s0, %s148
          %s151 = sshll.u32 %s144, 4
          %s152 = int_to_ptr.vmem [resolvable:$true] %s151
          %154 = dma.hbm_to_vmem [thread:$0]  %s149, 128, %s152, %s141
        $region24: #{tpu_custom_call.1} parent=19 // pred_fallthru
          _
      $region20: #{tpu_custom_call.1} parent=5 // pred_fallthru
        _
      %p155 = scmp.le.s32.totalorder 1, %s12
      %p156 = scmp.lt.s32.totalorder %s12, 17
      %p157 = pnand %p155, %p156
      %p158 = pneg %p157
      // Predicated region
      $region25: #{tpu_custom_call.1} parent=5 // pred_check
        _
      $region26: #{tpu_custom_call.1} parent=5 // pred_check_branch
        %160 = sbr.rel (%p157) target = $region28
      $region27: #{tpu_custom_call.1} parent=5 // pred_region
        %s161 = ssub.s32 %s12, 1
        %s162 = sand.u32 %s37, 1
        %s163 = scalar_lea.sflag [#allocation6], %s162
        %s164 = sand.u32 %s37, 1
        %s165 = smul.addr %s164, 8
        %s166 = scalar_lea.vmem [#allocation5], %s165
        // Predicated region
        $region29: #{tpu_custom_call.1} parent=27 // pred_check
          %p167 = pneg %p50
        $region30: #{tpu_custom_call.1} parent=27 // pred_check_branch
          %169 = sbr.rel (%p167) target = $region32
        $region31: #{tpu_custom_call.1} parent=27 // pred_region
          %170 = dma.done %s163, 128
        $region32: #{tpu_custom_call.1} parent=27 // pred_fallthru
          _
        // Predicated region
        $region33: #{tpu_custom_call.1} parent=27 // pred_check
          %p171 = pneg %p76
        $region34: #{tpu_custom_call.1} parent=27 // pred_check_branch
          %173 = sbr.rel (%p171) target = $region36
        $region35: #{tpu_custom_call.1} parent=27 // pred_region
          %174 = dma.done [#allocation8], 2048
        $region36: #{tpu_custom_call.1} parent=27 // pred_fallthru
          _
        %s175 = sand.u32 %s37, 1
        %s176 = scalar_lea.sflag [#allocation6], %s175
        %s177 = sand.u32 %s37, 1
        %s178 = smul.addr %s177, 8
        %s179 = scalar_lea.vmem [#allocation5], %s178
        %p180 = pneg %p50
        %p181 = pneg %p47
        %p182 = pneg %p76
        %p183 = pneg %p73
        %p184 = pneg %p102
        %p185 = pneg %p99
        %p186 = scmp.lt.s32.totalorder %s21, 15
        %s187 = scalar_select %p186, %s21, 15
        %s188 = smul.addr %s187, 8
        %s189 = scalar_lea.vmem %s2, %s188
        %s190 = smul.u32 16, %s22
        %p191 = scmp.lt.s32.totalorder %s21, 15
        %s192 = scalar_select %p191, %s21, 15
        %s193 = smul.addr %s192, 8
        %s194 = scalar_lea.vmem %s2, %s193
        %p195 = scmp.eq.s32.totalorder %s22, 0
        // Predicated region
        $region37: #{tpu_custom_call.1} parent=27 // pred_check
          %p196 = pneg %p195
        $region38: #{tpu_custom_call.1} parent=27 // pred_check_branch
          %198 = sbr.rel (%p196) target = $region40
        $region39: #{tpu_custom_call.1} parent=27 // pred_region
          %vm199 = vcmask 7168
          %200 = vst.msk [vmem:[#allocation2] sm:$0xff] %vm199, -inf
          %201 = vst.msk [vmem:[#allocation3] sm:$0xff] %vm199, 0.0
          %202 = vst.msk [vmem:[#allocation4] sm:$0xff] %vm199, 0.0
        $region40: #{tpu_custom_call.1} parent=27 // pred_fallthru
          _
        %v203 = vld [vmem:[%s166] sm:$0xff]
        %v204 = vld [vmem:[#allocation7] sm:$0xff]
        %v205 = vld [vmem:[#allocation7 + $0x8] sm:$0xff]
        %v206 = vld [vmem:[#allocation7 + $0x10] sm:$0xff]
        %v207 = vld [vmem:[#allocation7 + $0x18] sm:$0xff]
        %v208 = vld [vmem:[#allocation7 + $0x20] sm:$0xff]
        %v209 = vld [vmem:[#allocation7 + $0x28] sm:$0xff]
        %v210 = vld [vmem:[#allocation7 + $0x30] sm:$0xff]
        %v211 = vld [vmem:[#allocation7 + $0x38] sm:$0xff]
        %v212 = vld [vmem:[#allocation7 + $0x40] sm:$0xff]
        %v213 = vld [vmem:[#allocation7 + $0x48] sm:$0xff]
        %v214 = vld [vmem:[#allocation7 + $0x50] sm:$0xff]
        %v215 = vld [vmem:[#allocation7 + $0x58] sm:$0xff]
        %v216 = vld [vmem:[#allocation7 + $0x60] sm:$0xff]
        %v217 = vld [vmem:[#allocation7 + $0x68] sm:$0xff]
        %v218 = vld [vmem:[#allocation7 + $0x70] sm:$0xff]
        %v219 = vld [vmem:[#allocation7 + $0x78] sm:$0xff]
        %220 = vmatprep.subr.mxu0 0.0
        %221 = vmatpush1.xpose.msra.mxu0 %v204
        %222 = vmatprep.subr.mxu0 0.0
        %223 = vmatpush1.xpose.msra.mxu0 %v205
        %224 = vmatprep.subr.mxu0 0.0
        %225 = vmatpush1.xpose.msra.mxu0 %v206
        %226 = vmatprep.subr.mxu0 0.0
        %227 = vmatpush1.xpose.msra.mxu0 %v207
        %228 = vmatprep.subr.mxu0 0.0
        %229 = vmatpush1.xpose.msra.mxu0 %v208
        %230 = vmatprep.subr.mxu0 0.0
        %231 = vmatpush1.xpose.msra.mxu0 %v209
        %232 = vmatprep.subr.mxu0 0.0
        %233 = vmatpush1.xpose.msra.mxu0 %v210
        %234 = vmatprep.subr.mxu0 0.0
        %235 = vmatpush1.xpose.msra.mxu0 %v211
        %236 = vmatprep.subr.mxu0 0.0
        %237 = vmatpush1.xpose.msra.mxu0 %v212
        %238 = vmatprep.subr.mxu0 0.0
        %239 = vmatpush1.xpose.msra.mxu0 %v213
        %240 = vmatprep.subr.mxu0 0.0
        %241 = vmatpush1.xpose.msra.mxu0 %v214
        %242 = vmatprep.subr.mxu0 0.0
        %243 = vmatpush1.xpose.msra.mxu0 %v215
        %244 = vmatprep.subr.mxu0 0.0
        %245 = vmatpush1.xpose.msra.mxu0 %v216
        %246 = vmatprep.subr.mxu0 0.0
        %247 = vmatpush1.xpose.msra.mxu0 %v217
        %248 = vmatprep.subr.mxu0 0.0
        %249 = vmatpush1.xpose.msra.mxu0 %v218
        %250 = vmatprep.subr.mxu0 0.0
        %251 = vmatpush1.xpose.msra.mxu0 %v219
        %252 = vmatprep.subr.mxu0 0.0
        %253 = vmatpush1.xpose.msra.mxu0 0.0
        %254 = vmatprep.subr.mxu0 0.0
        %255 = vmatpush1.xpose.msra.mxu0 0.0
        %256 = vmatprep.subr.mxu0 0.0
        %257 = vmatpush1.xpose.msra.mxu0 0.0
        %258 = vmatprep.subr.mxu0 0.0
        %259 = vmatpush1.xpose.msra.mxu0 0.0
        %260 = vmatprep.subr.mxu0 0.0
        %261 = vmatpush1.xpose.msra.mxu0 0.0
        %262 = vmatprep.subr.mxu0 0.0
        %263 = vmatpush1.xpose.msra.mxu0 0.0
        %264 = vmatprep.subr.mxu0 0.0
        %265 = vmatpush1.xpose.msra.mxu0 0.0
        %266 = vmatprep.subr.mxu0 0.0
        %267 = vmatpush1.xpose.msra.mxu0 0.0
        %268 = vmatprep.subr.mxu0 0.0
        %269 = vmatpush1.xpose.msra.mxu0 0.0
        %270 = vmatprep.subr.mxu0 0.0
        %271 = vmatpush1.xpose.msra.mxu0 0.0
        %272 = vmatprep.subr.mxu0 0.0
        %273 = vmatpush1.xpose.msra.mxu0 0.0
        %274 = vmatprep.subr.mxu0 0.0
        %275 = vmatpush1.xpose.msra.mxu0 0.0
        %276 = vmatprep.subr.mxu0 0.0
        %277 = vmatpush1.xpose.msra.mxu0 0.0
        %278 = vmatprep.subr.mxu0 0.0
        %279 = vmatpush1.xpose.msra.mxu0 0.0
        %280 = vmatprep.subr.mxu0 0.0
        %281 = vmatpush1.xpose.msra.mxu0 0.0
        %282 = vmatprep.subr.mxu0 0.0
        %283 = vmatpush1.xpose.msra.mxu0 0.0
        %284 = vmatprep.mubr.f32.mxu0 0.0
        %285 = vmatmul.mubr.f32.gmra.mrb[0].mxu0 %v203
        %v286 = vpop.f32.mrb[0].mxu0
        %v287 = vadd.f32 0.0, %v286
        %v288 = vpop.f32.mrb[0].mxu0
        %289 = vdwg.mxu0
        %s290 = smul.u32 %s21, 8
        %v291 = vlaneseq
        %v292 = vshrl.u32 %v291, 7
        %v293 = vstv %s290
        %v294 = vadd.s32 %v293, %v292
        %s295 = smul.u32 %s22, 128
        %v296 = vlaneseq
        %v297 = vand.u32 %v296, 127
        %v298 = vstv %s295
        %v299 = vadd.s32 %v298, %v297
        %vm300 = vcmp.eq.s32.totalorder %v299, %v294
        %v301 = vmax.f32 %v287, -1.0
        %v302 = vmin.f32 %v301, 1.0
        %v303 = vsel %vm300, -1.0, %v302
        %v304 = vmul.f32 %v303, 2.0
        %vm305 = vcmp.lt.s32.totalorder %v299, 8
        %v306 = vsel %vm305, 1, 0
        %vm307 = vcmp.eq.s32.totalorder %v306, 1
        %v308 = vsel %vm307, %v304, -1e+30
        %v309 = vld [vmem:[#allocation2] sm:$0xff]
        %310 = vmax.xlane.f32.xlu0 %v308
        %v311 = vpop.xlane.xlu0 %310
        %v312 = vmax.f32 %v309, %v311
        %v313 = vsub.f32 %v309, %v312
        %v314 = vmul.f32 %v313, 1.442695
        %v315 = vpow.pop %v314
        %v316 = vld [vmem:[#allocation3] sm:$0xff]
        %v317 = vmul.f32 %v315, %v316
        %319 = vset.pattern.permute.xlu0 0
        %320 = vperm.xlu0 %319, %v312
        %v321 = vpop.permute.xlu0 %320
        %v323 = vsub.f32 %v308, %v321
        %v324 = vmul.f32 %v323, 1.442695
        %v325 = vpow.pop %v324
        %326 = vadd.xlane.f32.xlu0 %v325
        %v327 = vpop.xlane.xlu0 %326
        %v328 = vadd.f32 %v317, %v327
        %vm329 = vcmask 7168
        %330 = vst.msk [vmem:[#allocation3] sm:$0xff] %vm329, %v328
        %331 = vst.msk [vmem:[#allocation2] sm:$0xff] %vm329, %v312
        %vm332 = vcmp.lt.s32.totalorder %v294, 4
        %v333 = vsub.s32 %v294, 4
        %v334 = vsel %vm332, %v294, %v333
        %v335 = vld [vmem:[#allocation4] sm:$0xff]
        %vm336 = vcmp.eq.s32.totalorder %v299, %v334
        %v337 = vsel %vm336, %v308, 0.0
        %338 = vadd.xlane.f32.xlu0 %v337
        %v339 = vpop.xlane.xlu0 %338
        %v340 = vadd.f32 %v335, %v339
        %341 = vst.msk [vmem:[#allocation4] sm:$0xff] %vm329, %v340
        // Predicated region
        $region41: #{tpu_custom_call.1} parent=27 // pred_check
          %p342 = pneg %p195
        $region42: #{tpu_custom_call.1} parent=27 // pred_check_branch
          %344 = sbr.rel (%p342) target = $region44
        $region43: #{tpu_custom_call.1} parent=27 // pred_region
          %v345 = vld [vmem:[#allocation2] sm:$0xff]
          %v346 = vld [vmem:[#allocation3] sm:$0xff]
          %v347 = vlog2.pop %v346
          %v348 = vmul.f32 %v347, 0.6931472
          %v349 = vadd.f32 %v345, %v348
          %v350 = vld [vmem:[#allocation4] sm:$0xff]
          %v351 = vsub.f32 %v350, %v349
          %v352 = vsub.f32 0.0, %v351
          %vm353 = vcmp.lt.s32.totalorder %v294, 8
          %v354 = vsel %vm353, %v352, 0.0
          %355 = vst.msk [vmem:[%s194] sm:$0xff] %vm329, %v354
        $region44: #{tpu_custom_call.1} parent=27 // pred_fallthru
          _
        %p356 = scmp.lt.s32.totalorder %s21, 15
        %s357 = scalar_select %p356, %s21, 15
        %s358 = smul.addr %s357, 8
        %s359 = scalar_lea.vmem %s2, %s358
        // Predicated region
        $region45: #{tpu_custom_call.1} parent=27 // pred_check
          %p360 = pneg %p99
        $region46: #{tpu_custom_call.1} parent=27 // pred_check_branch
          %362 = sbr.rel (%p360) target = $region48
        $region47: #{tpu_custom_call.1} parent=27 // pred_region
          _
        $region48: #{tpu_custom_call.1} parent=27 // pred_fallthru
          _
      $region28: #{tpu_custom_call.1} parent=5 // pred_fallthru
        _
      %p363 = scmp.le.s32.totalorder 2, %s12
      // Predicated region
      $region49: #{tpu_custom_call.1} parent=5 // pred_check
        %p364 = pneg %p363
      $region50: #{tpu_custom_call.1} parent=5 // pred_check_branch
        %366 = sbr.rel (%p364) target = $region52
      $region51: #{tpu_custom_call.1} parent=5 // pred_region
        %s367 = ssub.s32 %s12, 2
        // Predicated region
        $region53: #{tpu_custom_call.1} parent=51 // pred_check
          %p368 = pneg %p105
        $region54: #{tpu_custom_call.1} parent=51 // pred_check_branch
          %370 = sbr.rel (%p368) target = $region56
        $region55: #{tpu_custom_call.1} parent=51 // pred_region
          %p371 = scmp.lt.s32.totalorder %s23, 15
          %s372 = scalar_select %p371, %s23, 15
          %s373 = smul.addr %s372, 8
          %s374 = scalar_lea.vmem %s2, %s373
        $region56: #{tpu_custom_call.1} parent=51 // pred_fallthru
          _
      $region52: #{tpu_custom_call.1} parent=5 // pred_fallthru
        _
    $region6: #{tpu_custom_call.1} parent=1 // loop_footer
      %s16 = sadd.s32 1, %s12
    $region7: #{tpu_custom_call.1} parent=1 // loop_footer_branch
      %11 = sbr.rel target = $region3
    $region8: #{tpu_custom_call.1} parent=1 // loop_exit
      _
    %375 = vsyncpa [#allocation6], 1
    %s376 = scalar_lea.sflag [#allocation6], 1
    %377 = vsyncpa %s376, 1
    %378 = vsyncpa [#allocation8], 1

</llo_original>
